<compile_context>
chip_gen: v7x
topology: tpu7x:2x2x1
jax: 0.10.0
libtpu: 0.0.40
codegen_flags: <defaults>
</compile_context>

<pallas_src>
import jax
import jax.numpy as jnp
from jax.experimental import pallas as pl
from jax.experimental.pallas import tpu as pltpu


def _make_kernel(n_l, l_blk, batch):
    """Kernel over one (l_blk latents) x (m_tile columns) block, all batches folded in."""

    def kernel(x_ref, w_ref, b_ref, o_ref):
        # x_ref: (B, l_blk, C_in, Mt)
        # w_ref: (L, C_out, C_in)   -- fully resident in VMEM (constant index_map)
        # b_ref: (L, C_out, 1)      -- fully resident in VMEM
        # o_ref: (l_blk, B, C_out, Mt)
        li = pl.program_id(0)
        for j in range(l_blk):  # static unroll; l_blk is 1 or L (small)
            lidx = j if n_l == 1 else li * l_blk + j
            w = w_ref[lidx]  # (C_out, C_in)
            b = b_ref[lidx]  # (C_out, 1)
            for bb in range(batch):  # static unroll over batch; dots are tiny, mem-bound anyway
                y = jnp.dot(w, x_ref[bb, j], preferred_element_type=jnp.float32)  # (C_out, Mt)
                o_ref[j, bb] = (y + b).astype(o_ref.dtype)  # lane-dense (Mt % 128 == 0) store

    return kernel


def _choose_tiling(L, B, c_in, c_out, M_pad, itemsize,
                   budget_bytes=4 << 20, max_tile=4096):
    """Pick (l_blk, m_tile): largest lane-dense tile under a per-block byte budget.

    Prefers l_blk = L (all latents per grid step -> fewest steps); falls back to l_blk = 1.
    The budget keeps double-buffered x + out blocks ~<= 16 MiB, safe on v5e/v6e (128 MiB VMEM)
    and v7x (64 MiB VMEM, 32 MiB default scoped limit)."""
    per_m_per_latent = B * max(c_in, c_out) * itemsize  # bytes per output column, per latent

    def best_tile(l_blk):
        per_m = l_blk * per_m_per_latent
        cap = min(max_tile, M_pad, (budget_bytes // per_m) // 128 * 128)
        if cap < 128:
            return None
        best = 128  # always divides M_pad (padded to a multiple of 128)
        t = 256
        while t <= cap:
            if M_pad % t == 0:
                best = t
            t += 128
        return best

    tile = best_tile(L)
    if tile is not None:
        return L, tile
    tile = best_tile(1)
    return 1, (tile if tile is not None else 128)


def interp_net_conv(x, weights, biases):
    """x: [B, n_latents, C_in, H, W]; weights: [n_latents, C_out, C_in];
    biases: [n_latents, C_out].  Returns [n_latents, B, C_out, H, W]."""
    B, L, c_in, H, W = x.shape
    c_out = weights.shape[1]
    M = H * W
    M_pad = -(-M // 128) * 128  # lane-dense: >= 128 and a multiple of 128

    # Free reshape (H, W contiguous); pad M only when needed (guarantees unmasked vector stores).
    x_k = x.reshape(B, L, c_in, M)
    if M_pad != M:
        x_k = jnp.pad(x_k, ((0, 0), (0, 0), (0, 0), (0, M_pad - M)))
    b_k = biases.reshape(L, c_out, 1)

    itemsize = jnp.dtype(x.dtype).itemsize
    l_blk, m_tile = _choose_tiling(L, B, c_in, c_out, M_pad, itemsize)
    n_l = L // l_blk
    n_m = M_pad // m_tile

    out = pl.pallas_call(
        _make_kernel(n_l, l_blk, B),
        out_shape=jax.ShapeDtypeStruct((L, B, c_out, M_pad), x.dtype),
        grid_spec=pl.GridSpec(
            grid=(n_l, n_m),
            in_specs=[
                # x: [B, L, C_in, M_pad] -> (B, l_blk, C_in, m_tile) block
                pl.BlockSpec((B, l_blk, c_in, m_tile), lambda li, mi: (0, li, 0, mi)),
                # weights: fully resident (constant block index -> fetched once, never re-DMA'd)
                pl.BlockSpec((L, c_out, c_in), lambda li, mi: (0, 0, 0)),
                # biases: fully resident
                pl.BlockSpec((L, c_out, 1), lambda li, mi: (0, 0, 0)),
            ],
            # out: [L, B, C_out, M_pad] -> (l_blk, B, C_out, m_tile) block, lane-dense last dim
            out_specs=pl.BlockSpec((l_blk, B, c_out, m_tile), lambda li, mi: (li, 0, 0, mi)),
        ),
        compiler_params=pltpu.CompilerParams(
            # Both axes independent -> megacore sharding on v7x; no-op on v5e/v6e (single TC).
            dimension_semantics=("parallel", "parallel"),
        ),
    )(x_k, weights, b_k)

    if M_pad != M:
        out = out[..., :M]
    # [L, B, C_out, M] -> [L, B, C_out, H, W]  (free reshape)
    return out.reshape(L, B, c_out, H, W)


def _reference(x, weights, biases):
    # Pure-JAX reference of the PyTorch forward (1x1 conv == channel einsum, stacked over latents).
    y = jnp.einsum("blihw,loi->lbohw", x, weights)
    return y + biases[:, None, :, None, None]


if __name__ == "__main__":
    # Module config: input_dim = (c_in, H, W), n_latents
    c_in, H, W = 9, 8, 8
    c_out = int((c_in - 1) / 2)  # = 4
    n_latents = 4
    B = 2

    key = jax.random.PRNGKey(0)
    kx, kw, kb = jax.random.split(key, 3)

    x = jax.random.normal(kx, (B, n_latents, c_in, H, W), dtype=jnp.float32)
    # Deterministic synthetic parameters (one Conv2d(c_in->c_out, k=1) per latent).
    weights = jax.random.normal(kw, (n_latents, c_out, c_in), dtype=jnp.float32) * 0.1
    biases = jax.random.normal(kb, (n_latents, c_out), dtype=jnp.float32) * 0.1

    out = interp_net_conv(x, weights, biases)
    out = jax.block_until_ready(out)

    ref = _reference(x, weights, biases)
    assert out.shape == (n_latents, B, c_out, H, W)
    assert jnp.allclose(out, ref, atol=1e-5, rtol=1e-5)

    print("KERNEL_OK")
</pallas_src>

<mosaic_0001>
module attributes {stable_mosaic.version = 11 : i64} {
  func.func @kernel(%arg0: i32, %arg1: i32, %arg2: memref<2x4x9x128xf32, #tpu.memory_space<vmem>>, %arg3: memref<4x4x9xf32, #tpu.memory_space<vmem>>, %arg4: memref<4x4x1xf32, #tpu.memory_space<vmem>>, %arg5: memref<4x2x4x128xf32, #tpu.memory_space<vmem>>) attributes {dimension_semantics = [#tpu.dimension_semantics<parallel>, #tpu.dimension_semantics<parallel>], iteration_bounds = array<i64: 1, 1>, scalar_prefetch = 0 : i64, scratch_operands = 0 : i64, tpu.core_type = #tpu.core_type<tc>, window_params = [{transform_indices = @transform_0, window_bounds = array<i64: 2, 4, 9, 128>}, {pipeline_mode = #tpu.pipeline_mode<synchronous>, transform_indices = @transform_1, window_bounds = array<i64: 4, 4, 9>}, {pipeline_mode = #tpu.pipeline_mode<synchronous>, transform_indices = @transform_2, window_bounds = array<i64: 4, 4, 1>}, {transform_indices = @transform_3, window_bounds = array<i64: 4, 2, 4, 128>}]} {
    %c0 = arith.constant 0 : index
    %c0_0 = arith.constant 0 : index
    %c0_1 = arith.constant 0 : index
    %0 = vector.load %arg3[%c0, %c0_0, %c0_1] : memref<4x4x9xf32, #tpu.memory_space<vmem>>, vector<1x4x9xf32>
    %1 = vector.shape_cast %0 : vector<1x4x9xf32> to vector<4x9xf32>
    %c0_2 = arith.constant 0 : index
    %c0_3 = arith.constant 0 : index
    %c0_4 = arith.constant 0 : index
    %2 = vector.load %arg4[%c0_2, %c0_3, %c0_4] : memref<4x4x1xf32, #tpu.memory_space<vmem>>, vector<1x4x1xf32>
    %3 = vector.shape_cast %2 : vector<1x4x1xf32> to vector<4x1xf32>
    %c0_5 = arith.constant 0 : index
    %c0_6 = arith.constant 0 : index
    %c0_7 = arith.constant 0 : index
    %c0_8 = arith.constant 0 : index
    %4 = vector.load %arg2[%c0_5, %c0_6, %c0_7, %c0_8] : memref<2x4x9x128xf32, #tpu.memory_space<vmem>>, vector<1x1x9x128xf32>
    %5 = vector.shape_cast %4 : vector<1x1x9x128xf32> to vector<9x128xf32>
    %cst = arith.constant dense<0.000000e+00> : vector<4x128xf32>
    %6 = tpu.matmul %1, %5, %cst {dimension_numbers = #tpu.dot_dimension_numbers<[1], [0], [0], [1], [0, 0, 1, 1], [], []>} : vector<4x9xf32>, vector<9x128xf32>, vector<4x128xf32> -> vector<4x128xf32>
    %7 = vector.broadcast %3 : vector<4x1xf32> to vector<4x128xf32>
    %8 = arith.addf %6, %7 : vector<4x128xf32>
    %c0_9 = arith.constant 0 : index
    %c0_10 = arith.constant 0 : index
    %c0_11 = arith.constant 0 : index
    %c0_12 = arith.constant 0 : index
    %9 = vector.load %arg5[%c0_9, %c0_10, %c0_11, %c0_12] : memref<4x2x4x128xf32, #tpu.memory_space<vmem>>, vector<1x1x4x128xf32>
    %10 = vector.shape_cast %9 : vector<1x1x4x128xf32> to vector<4x128xf32>
    %11 = vector.shape_cast %8 : vector<4x128xf32> to vector<1x1x4x128xf32>
    tpu.vector_store %arg5[%c0_9, %c0_10, %c0_11, %c0_12], %11 {strides = array<i32>} : memref<4x2x4x128xf32, #tpu.memory_space<vmem>>, vector<1x1x4x128xf32>,
    %c1 = arith.constant 1 : index
    %c0_13 = arith.constant 0 : index
    %c0_14 = arith.constant 0 : index
    %c0_15 = arith.constant 0 : index
    %12 = vector.load %arg2[%c1, %c0_13, %c0_14, %c0_15] : memref<2x4x9x128xf32, #tpu.memory_space<vmem>>, vector<1x1x9x128xf32>
    %13 = vector.shape_cast %12 : vector<1x1x9x128xf32> to vector<9x128xf32>
    %cst_16 = arith.constant dense<0.000000e+00> : vector<4x128xf32>
    %14 = tpu.matmul %1, %13, %cst_16 {dimension_numbers = #tpu.dot_dimension_numbers<[1], [0], [0], [1], [0, 0, 1, 1], [], []>} : vector<4x9xf32>, vector<9x128xf32>, vector<4x128xf32> -> vector<4x128xf32>
    %15 = vector.broadcast %3 : vector<4x1xf32> to vector<4x128xf32>
    %16 = arith.addf %14, %15 : vector<4x128xf32>
    %c0_17 = arith.constant 0 : index
    %c1_18 = arith.constant 1 : index
    %c0_19 = arith.constant 0 : index
    %c0_20 = arith.constant 0 : index
    %17 = vector.load %arg5[%c0_17, %c1_18, %c0_19, %c0_20] : memref<4x2x4x128xf32, #tpu.memory_space<vmem>>, vector<1x1x4x128xf32>
    %18 = vector.shape_cast %17 : vector<1x1x4x128xf32> to vector<4x128xf32>
    %19 = vector.shape_cast %16 : vector<4x128xf32> to vector<1x1x4x128xf32>
    tpu.vector_store %arg5[%c0_17, %c1_18, %c0_19, %c0_20], %19 {strides = array<i32>} : memref<4x2x4x128xf32, #tpu.memory_space<vmem>>, vector<1x1x4x128xf32>,
    %c1_21 = arith.constant 1 : index
    %c0_22 = arith.constant 0 : index
    %c0_23 = arith.constant 0 : index
    %20 = vector.load %arg3[%c1_21, %c0_22, %c0_23] : memref<4x4x9xf32, #tpu.memory_space<vmem>>, vector<1x4x9xf32>
    %21 = vector.shape_cast %20 : vector<1x4x9xf32> to vector<4x9xf32>
    %c1_24 = arith.constant 1 : index
    %c0_25 = arith.constant 0 : index
    %c0_26 = arith.constant 0 : index
    %22 = vector.load %arg4[%c1_24, %c0_25, %c0_26] : memref<4x4x1xf32, #tpu.memory_space<vmem>>, vector<1x4x1xf32>
    %23 = vector.shape_cast %22 : vector<1x4x1xf32> to vector<4x1xf32>
    %c0_27 = arith.constant 0 : index
    %c1_28 = arith.constant 1 : index
    %c0_29 = arith.constant 0 : index
    %c0_30 = arith.constant 0 : index
    %24 = vector.load %arg2[%c0_27, %c1_28, %c0_29, %c0_30] : memref<2x4x9x128xf32, #tpu.memory_space<vmem>>, vector<1x1x9x128xf32>
    %25 = vector.shape_cast %24 : vector<1x1x9x128xf32> to vector<9x128xf32>
    %cst_31 = arith.constant dense<0.000000e+00> : vector<4x128xf32>
    %26 = tpu.matmul %21, %25, %cst_31 {dimension_numbers = #tpu.dot_dimension_numbers<[1], [0], [0], [1], [0, 0, 1, 1], [], []>} : vector<4x9xf32>, vector<9x128xf32>, vector<4x128xf32> -> vector<4x128xf32>
    %27 = vector.broadcast %23 : vector<4x1xf32> to vector<4x128xf32>
    %28 = arith.addf %26, %27 : vector<4x128xf32>
    %c1_32 = arith.constant 1 : index
    %c0_33 = arith.constant 0 : index
    %c0_34 = arith.constant 0 : index
    %c0_35 = arith.constant 0 : index
    %29 = vector.load %arg5[%c1_32, %c0_33, %c0_34, %c0_35] : memref<4x2x4x128xf32, #tpu.memory_space<vmem>>, vector<1x1x4x128xf32>
    %30 = vector.shape_cast %29 : vector<1x1x4x128xf32> to vector<4x128xf32>
    %31 = vector.shape_cast %28 : vector<4x128xf32> to vector<1x1x4x128xf32>
    tpu.vector_store %arg5[%c1_32, %c0_33, %c0_34, %c0_35], %31 {strides = array<i32>} : memref<4x2x4x128xf32, #tpu.memory_space<vmem>>, vector<1x1x4x128xf32>,
    %c1_36 = arith.constant 1 : index
    %c1_37 = arith.constant 1 : index
    %c0_38 = arith.constant 0 : index
    %c0_39 = arith.constant 0 : index
    %32 = vector.load %arg2[%c1_36, %c1_37, %c0_38, %c0_39] : memref<2x4x9x128xf32, #tpu.memory_space<vmem>>, vector<1x1x9x128xf32>
    %33 = vector.shape_cast %32 : vector<1x1x9x128xf32> to vector<9x128xf32>
    %cst_40 = arith.constant dense<0.000000e+00> : vector<4x128xf32>
    %34 = tpu.matmul %21, %33, %cst_40 {dimension_numbers = #tpu.dot_dimension_numbers<[1], [0], [0], [1], [0, 0, 1, 1], [], []>} : vector<4x9xf32>, vector<9x128xf32>, vector<4x128xf32> -> vector<4x128xf32>
    %35 = vector.broadcast %23 : vector<4x1xf32> to vector<4x128xf32>
    %36 = arith.addf %34, %35 : vector<4x128xf32>
    %c1_41 = arith.constant 1 : index
    %c1_42 = arith.constant 1 : index
    %c0_43 = arith.constant 0 : index
    %c0_44 = arith.constant 0 : index
    %37 = vector.load %arg5[%c1_41, %c1_42, %c0_43, %c0_44] : memref<4x2x4x128xf32, #tpu.memory_space<vmem>>, vector<1x1x4x128xf32>
    %38 = vector.shape_cast %37 : vector<1x1x4x128xf32> to vector<4x128xf32>
    %39 = vector.shape_cast %36 : vector<4x128xf32> to vector<1x1x4x128xf32>
    tpu.vector_store %arg5[%c1_41, %c1_42, %c0_43, %c0_44], %39 {strides = array<i32>} : memref<4x2x4x128xf32, #tpu.memory_space<vmem>>, vector<1x1x4x128xf32>,
    %c2 = arith.constant 2 : index
    %c0_45 = arith.constant 0 : index
    %c0_46 = arith.constant 0 : index
    %40 = vector.load %arg3[%c2, %c0_45, %c0_46] : memref<4x4x9xf32, #tpu.memory_space<vmem>>, vector<1x4x9xf32>
    %41 = vector.shape_cast %40 : vector<1x4x9xf32> to vector<4x9xf32>
    %c2_47 = arith.constant 2 : index
    %c0_48 = arith.constant 0 : index
    %c0_49 = arith.constant 0 : index
    %42 = vector.load %arg4[%c2_47, %c0_48, %c0_49] : memref<4x4x1xf32, #tpu.memory_space<vmem>>, vector<1x4x1xf32>
    %43 = vector.shape_cast %42 : vector<1x4x1xf32> to vector<4x1xf32>
    %c0_50 = arith.constant 0 : index
    %c2_51 = arith.constant 2 : index
    %c0_52 = arith.constant 0 : index
    %c0_53 = arith.constant 0 : index
    %44 = vector.load %arg2[%c0_50, %c2_51, %c0_52, %c0_53] : memref<2x4x9x128xf32, #tpu.memory_space<vmem>>, vector<1x1x9x128xf32>
    %45 = vector.shape_cast %44 : vector<1x1x9x128xf32> to vector<9x128xf32>
    %cst_54 = arith.constant dense<0.000000e+00> : vector<4x128xf32>
    %46 = tpu.matmul %41, %45, %cst_54 {dimension_numbers = #tpu.dot_dimension_numbers<[1], [0], [0], [1], [0, 0, 1, 1], [], []>} : vector<4x9xf32>, vector<9x128xf32>, vector<4x128xf32> -> vector<4x128xf32>
    %47 = vector.broadcast %43 : vector<4x1xf32> to vector<4x128xf32>
    %48 = arith.addf %46, %47 : vector<4x128xf32>
    %c2_55 = arith.constant 2 : index
    %c0_56 = arith.constant 0 : index
    %c0_57 = arith.constant 0 : index
    %c0_58 = arith.constant 0 : index
    %49 = vector.load %arg5[%c2_55, %c0_56, %c0_57, %c0_58] : memref<4x2x4x128xf32, #tpu.memory_space<vmem>>, vector<1x1x4x128xf32>
    %50 = vector.shape_cast %49 : vector<1x1x4x128xf32> to vector<4x128xf32>
    %51 = vector.shape_cast %48 : vector<4x128xf32> to vector<1x1x4x128xf32>
    tpu.vector_store %arg5[%c2_55, %c0_56, %c0_57, %c0_58], %51 {strides = array<i32>} : memref<4x2x4x128xf32, #tpu.memory_space<vmem>>, vector<1x1x4x128xf32>,
    %c1_59 = arith.constant 1 : index
    %c2_60 = arith.constant 2 : index
    %c0_61 = arith.constant 0 : index
    %c0_62 = arith.constant 0 : index
    %52 = vector.load %arg2[%c1_59, %c2_60, %c0_61, %c0_62] : memref<2x4x9x128xf32, #tpu.memory_space<vmem>>, vector<1x1x9x128xf32>
    %53 = vector.shape_cast %52 : vector<1x1x9x128xf32> to vector<9x128xf32>
    %cst_63 = arith.constant dense<0.000000e+00> : vector<4x128xf32>
    %54 = tpu.matmul %41, %53, %cst_63 {dimension_numbers = #tpu.dot_dimension_numbers<[1], [0], [0], [1], [0, 0, 1, 1], [], []>} : vector<4x9xf32>, vector<9x128xf32>, vector<4x128xf32> -> vector<4x128xf32>
    %55 = vector.broadcast %43 : vector<4x1xf32> to vector<4x128xf32>
    %56 = arith.addf %54, %55 : vector<4x128xf32>
    %c2_64 = arith.constant 2 : index
    %c1_65 = arith.constant 1 : index
    %c0_66 = arith.constant 0 : index
    %c0_67 = arith.constant 0 : index
    %57 = vector.load %arg5[%c2_64, %c1_65, %c0_66, %c0_67] : memref<4x2x4x128xf32, #tpu.memory_space<vmem>>, vector<1x1x4x128xf32>
    %58 = vector.shape_cast %57 : vector<1x1x4x128xf32> to vector<4x128xf32>
    %59 = vector.shape_cast %56 : vector<4x128xf32> to vector<1x1x4x128xf32>
    tpu.vector_store %arg5[%c2_64, %c1_65, %c0_66, %c0_67], %59 {strides = array<i32>} : memref<4x2x4x128xf32, #tpu.memory_space<vmem>>, vector<1x1x4x128xf32>,
    %c3 = arith.constant 3 : index
    %c0_68 = arith.constant 0 : index
    %c0_69 = arith.constant 0 : index
    %60 = vector.load %arg3[%c3, %c0_68, %c0_69] : memref<4x4x9xf32, #tpu.memory_space<vmem>>, vector<1x4x9xf32>
    %61 = vector.shape_cast %60 : vector<1x4x9xf32> to vector<4x9xf32>
    %c3_70 = arith.constant 3 : index
    %c0_71 = arith.constant 0 : index
    %c0_72 = arith.constant 0 : index
    %62 = vector.load %arg4[%c3_70, %c0_71, %c0_72] : memref<4x4x1xf32, #tpu.memory_space<vmem>>, vector<1x4x1xf32>
    %63 = vector.shape_cast %62 : vector<1x4x1xf32> to vector<4x1xf32>
    %c0_73 = arith.constant 0 : index
    %c3_74 = arith.constant 3 : index
    %c0_75 = arith.constant 0 : index
    %c0_76 = arith.constant 0 : index
    %64 = vector.load %arg2[%c0_73, %c3_74, %c0_75, %c0_76] : memref<2x4x9x128xf32, #tpu.memory_space<vmem>>, vector<1x1x9x128xf32>
    %65 = vector.shape_cast %64 : vector<1x1x9x128xf32> to vector<9x128xf32>
    %cst_77 = arith.constant dense<0.000000e+00> : vector<4x128xf32>
    %66 = tpu.matmul %61, %65, %cst_77 {dimension_numbers = #tpu.dot_dimension_numbers<[1], [0], [0], [1], [0, 0, 1, 1], [], []>} : vector<4x9xf32>, vector<9x128xf32>, vector<4x128xf32> -> vector<4x128xf32>
    %67 = vector.broadcast %63 : vector<4x1xf32> to vector<4x128xf32>
    %68 = arith.addf %66, %67 : vector<4x128xf32>
    %c3_78 = arith.constant 3 : index
    %c0_79 = arith.constant 0 : index
    %c0_80 = arith.constant 0 : index
    %c0_81 = arith.constant 0 : index
    %69 = vector.load %arg5[%c3_78, %c0_79, %c0_80, %c0_81] : memref<4x2x4x128xf32, #tpu.memory_space<vmem>>, vector<1x1x4x128xf32>
    %70 = vector.shape_cast %69 : vector<1x1x4x128xf32> to vector<4x128xf32>
    %71 = vector.shape_cast %68 : vector<4x128xf32> to vector<1x1x4x128xf32>
    tpu.vector_store %arg5[%c3_78, %c0_79, %c0_80, %c0_81], %71 {strides = array<i32>} : memref<4x2x4x128xf32, #tpu.memory_space<vmem>>, vector<1x1x4x128xf32>,
    %c1_82 = arith.constant 1 : index
    %c3_83 = arith.constant 3 : index
    %c0_84 = arith.constant 0 : index
    %c0_85 = arith.constant 0 : index
    %72 = vector.load %arg2[%c1_82, %c3_83, %c0_84, %c0_85] : memref<2x4x9x128xf32, #tpu.memory_space<vmem>>, vector<1x1x9x128xf32>
    %73 = vector.shape_cast %72 : vector<1x1x9x128xf32> to vector<9x128xf32>
    %cst_86 = arith.constant dense<0.000000e+00> : vector<4x128xf32>
    %74 = tpu.matmul %61, %73, %cst_86 {dimension_numbers = #tpu.dot_dimension_numbers<[1], [0], [0], [1], [0, 0, 1, 1], [], []>} : vector<4x9xf32>, vector<9x128xf32>, vector<4x128xf32> -> vector<4x128xf32>
    %75 = vector.broadcast %63 : vector<4x1xf32> to vector<4x128xf32>
    %76 = arith.addf %74, %75 : vector<4x128xf32>
    %c3_87 = arith.constant 3 : index
    %c1_88 = arith.constant 1 : index
    %c0_89 = arith.constant 0 : index
    %c0_90 = arith.constant 0 : index
    %77 = vector.load %arg5[%c3_87, %c1_88, %c0_89, %c0_90] : memref<4x2x4x128xf32, #tpu.memory_space<vmem>>, vector<1x1x4x128xf32>
    %78 = vector.shape_cast %77 : vector<1x1x4x128xf32> to vector<4x128xf32>
    %79 = vector.shape_cast %76 : vector<4x128xf32> to vector<1x1x4x128xf32>
    tpu.vector_store %arg5[%c3_87, %c1_88, %c0_89, %c0_90], %79 {strides = array<i32>} : memref<4x2x4x128xf32, #tpu.memory_space<vmem>>, vector<1x1x4x128xf32>,
    return
  }
  func.func @transform_0(%arg0: i32, %arg1: i32) -> (i32, i32, i32, i32) {
    %c0_i32 = arith.constant 0 : i32
    %c0_i32_0 = arith.constant 0 : i32
    %c0_i32_1 = arith.constant 0 : i32
    return %c0_i32, %arg0, %c0_i32_0, %arg1 : i32, i32, i32, i32
  }
  func.func @transform_1(%arg0: i32, %arg1: i32) -> (i32, i32, i32) {
    %c0_i32 = arith.constant 0 : i32
    %c0_i32_0 = arith.constant 0 : i32
    %c0_i32_1 = arith.constant 0 : i32
    %c0_i32_2 = arith.constant 0 : i32
    return %c0_i32, %c0_i32_0, %c0_i32_1 : i32, i32, i32
  }
  func.func @transform_2(%arg0: i32, %arg1: i32) -> (i32, i32, i32) {
    %c0_i32 = arith.constant 0 : i32
    %c0_i32_0 = arith.constant 0 : i32
    %c0_i32_1 = arith.constant 0 : i32
    %c0_i32_2 = arith.constant 0 : i32
    return %c0_i32, %c0_i32_0, %c0_i32_1 : i32, i32, i32
  }
  func.func @transform_3(%arg0: i32, %arg1: i32) -> (i32, i32, i32, i32) {
    %c0_i32 = arith.constant 0 : i32
    %c0_i32_0 = arith.constant 0 : i32
    %c0_i32_1 = arith.constant 0 : i32
    return %arg0, %c0_i32, %c0_i32_0, %arg1 : i32, i32, i32, i32
  }
}

</mosaic_0001>

<llo_original>
// kernel: tpu_custom_call.1
$region0: #{tpu_custom_call.1}
  #allocation0 [shape = 'u32[]', space=smem, size = 0x4, offset = 0x4, fixed_abs, tag = 'smem constant byte address 0x4 - core index']
  #allocation1 [shape = 'u32[144,128]{1,0:T(1,128)}', space=vmem, size = 0x12000, scoped, tag = 'internal scratch']
  %s0 = inlined_call_operand.vmem [shape: f32[2,4,9,128], index: 0, kind: input, shape index: {}]
  %s1 = inlined_call_operand.vmem [shape: f32[4,4,9], index: 1, kind: input, shape index: {}]
  %s2 = inlined_call_operand.vmem [shape: f32[4,4,1], index: 2, kind: input, shape index: {}]
  %s3 = inlined_call_operand.hbm [shape: f32[4,2,4,128], index: 3, kind: output, shape index: {}]
  %s4 = sld [smem:[#allocation0]]
  $region22: #{tpu_custom_call.1} parent=0
    _
  %s6 = ssub.s32 1, %s4
  %s7 = scalar_select 0, %s6, %s4
  $region1: #{tpu_custom_call.1} parent=0
    #allocation2 [shape = 'u8[16384]{0}', space=vmem, size = 0x4000, scoped, tag = 'output window, operand 0, single buffered']
    #allocation3 [shape = 's32[1]{0}', space=sflag, size = 0x4, scoped, tag = 'scoped memory for tpu_custom_call.1']
    %8 = vsyncpa [#allocation3], 0
    // Predicated region
    $region2: #{tpu_custom_call.1} parent=1 // pred_check
      _
    $region3: #{tpu_custom_call.1} parent=1 // pred_check_branch
      %10 = sbr.rel (0) target = $region5
    $region4: #{tpu_custom_call.1} parent=1 // pred_region
      _
    $region5: #{tpu_custom_call.1} parent=1 // pred_fallthru
      _
    // Predicated region
    $region6: #{tpu_custom_call.1} parent=1 // pred_check
      _
    $region7: #{tpu_custom_call.1} parent=1 // pred_check_branch
      %12 = sbr.rel (0) target = $region9
    $region8: #{tpu_custom_call.1} parent=1 // pred_region
      _
    $region9: #{tpu_custom_call.1} parent=1 // pred_fallthru
      _
    // Predicated region
    $region10: #{tpu_custom_call.1} parent=1 // pred_check
      _
    $region11: #{tpu_custom_call.1} parent=1 // pred_check_branch
      %14 = sbr.rel (0) target = $region13
    $region12: #{tpu_custom_call.1} parent=1 // pred_region
      _
    $region13: #{tpu_custom_call.1} parent=1 // pred_fallthru
      _
    %v15 = vld [vmem:[%s1] sm:$0xf]
    %v16 = vld [vmem:[%s2] sm:$0xf]
    %v17 = vld [vmem:[%s0] sm:$0xff]
    %v18 = vld [vmem:[%s0 + $0x8] sm:$0x1]
    %20 = vset.pattern.permute.xlu0 0
    %21 = vperm.xlu0 %20, %v16
    %v22 = vpop.permute.xlu0 %21
    %vm24 = vcmask 72704
    %v26 = vsel %vm24, %v15, 0
    %vm28 = vcmask 1040384
    %v30 = vsel %vm28, %v18, 0
    %32 = vmatprep.subr.mxu0 0.0
    %33 = vmatpush1.msra.mxu0 %v17
    %34 = vmatprep.subr.mxu0 0.0
    %35 = vmatpush1.msra.mxu0 %v30
    %36 = vmatprep.subr.mxu0 0.0
    %37 = vmatpush1.msra.mxu0 0.0
    %38 = vmatprep.subr.mxu0 0.0
    %39 = vmatpush1.msra.mxu0 0.0
    %40 = vmatprep.subr.mxu0 0.0
    %41 = vmatpush1.msra.mxu0 0.0
    %42 = vmatprep.subr.mxu0 0.0
    %43 = vmatpush1.msra.mxu0 0.0
    %44 = vmatprep.subr.mxu0 0.0
    %45 = vmatpush1.msra.mxu0 0.0
    %46 = vmatprep.subr.mxu0 0.0
    %47 = vmatpush1.msra.mxu0 0.0
    %48 = vmatprep.subr.mxu0 0.0
    %49 = vmatpush1.msra.mxu0 0.0
    %50 = vmatprep.subr.mxu0 0.0
    %51 = vmatpush1.msra.mxu0 0.0
    %52 = vmatprep.subr.mxu0 0.0
    %53 = vmatpush1.msra.mxu0 0.0
    %54 = vmatprep.subr.mxu0 0.0
    %55 = vmatpush1.msra.mxu0 0.0
    %56 = vmatprep.subr.mxu0 0.0
    %57 = vmatpush1.msra.mxu0 0.0
    %58 = vmatprep.subr.mxu0 0.0
    %59 = vmatpush1.msra.mxu0 0.0
    %60 = vmatprep.subr.mxu0 0.0
    %61 = vmatpush1.msra.mxu0 0.0
    %62 = vmatprep.subr.mxu0 0.0
    %63 = vmatpush1.msra.mxu0 0.0
    %64 = vmatprep.subr.mxu0 0.0
    %65 = vmatpush1.msra.mxu0 0.0
    %66 = vmatprep.subr.mxu0 0.0
    %67 = vmatpush1.msra.mxu0 0.0
    %68 = vmatprep.subr.mxu0 0.0
    %69 = vmatpush1.msra.mxu0 0.0
    %70 = vmatprep.subr.mxu0 0.0
    %71 = vmatpush1.msra.mxu0 0.0
    %72 = vmatprep.subr.mxu0 0.0
    %73 = vmatpush1.msra.mxu0 0.0
    %74 = vmatprep.subr.mxu0 0.0
    %75 = vmatpush1.msra.mxu0 0.0
    %76 = vmatprep.subr.mxu0 0.0
    %77 = vmatpush1.msra.mxu0 0.0
    %78 = vmatprep.subr.mxu0 0.0
    %79 = vmatpush1.msra.mxu0 0.0
    %80 = vmatprep.subr.mxu0 0.0
    %81 = vmatpush1.msra.mxu0 0.0
    %82 = vmatprep.subr.mxu0 0.0
    %83 = vmatpush1.msra.mxu0 0.0
    %84 = vmatprep.subr.mxu0 0.0
    %85 = vmatpush1.msra.mxu0 0.0
    %86 = vmatprep.subr.mxu0 0.0
    %87 = vmatpush1.msra.mxu0 0.0
    %88 = vmatprep.subr.mxu0 0.0
    %89 = vmatpush1.msra.mxu0 0.0
    %90 = vmatprep.subr.mxu0 0.0
    %91 = vmatpush1.msra.mxu0 0.0
    %92 = vmatprep.subr.mxu0 0.0
    %93 = vmatpush1.msra.mxu0 0.0
    %94 = vmatprep.subr.mxu0 0.0
    %95 = vmatpush1.msra.mxu0 0.0
    %96 = vmatprep.mubr.f32.mxu0 0.0
    %97 = vmatmul.mubr.f32.gmra.mrb[0].mxu0 %v26
    %v98 = vpop.f32.mrb[0].mxu0
    %v99 = vadd.f32 %v22, %v98
    %v100 = vpop.f32.mrb[0].mxu0
    %101 = vdwg.mxu0
    %102 = vst [vmem:[#allocation2] sm:$0xf] %v99
    %s103 = scalar_lea.vmem %s0, 64
    %v104 = vld [vmem:[%s103] sm:$0xff]
    %v105 = vld [vmem:[%s103 + $0x8] sm:$0x1]
    %v107 = vsel %vm28, %v105, 0
    %109 = vmatprep.subr.mxu0 0.0
    %110 = vmatpush1.msra.mxu0 %v104
    %111 = vmatprep.subr.mxu0 0.0
    %112 = vmatpush1.msra.mxu0 %v107
    %113 = vmatprep.subr.mxu0 0.0
    %114 = vmatpush1.msra.mxu0 0.0
    %115 = vmatprep.subr.mxu0 0.0
    %116 = vmatpush1.msra.mxu0 0.0
    %117 = vmatprep.subr.mxu0 0.0
    %118 = vmatpush1.msra.mxu0 0.0
    %119 = vmatprep.subr.mxu0 0.0
    %120 = vmatpush1.msra.mxu0 0.0
    %121 = vmatprep.subr.mxu0 0.0
    %122 = vmatpush1.msra.mxu0 0.0
    %123 = vmatprep.subr.mxu0 0.0
    %124 = vmatpush1.msra.mxu0 0.0
    %125 = vmatprep.subr.mxu0 0.0
    %126 = vmatpush1.msra.mxu0 0.0
    %127 = vmatprep.subr.mxu0 0.0
    %128 = vmatpush1.msra.mxu0 0.0
    %129 = vmatprep.subr.mxu0 0.0
    %130 = vmatpush1.msra.mxu0 0.0
    %131 = vmatprep.subr.mxu0 0.0
    %132 = vmatpush1.msra.mxu0 0.0
    %133 = vmatprep.subr.mxu0 0.0
    %134 = vmatpush1.msra.mxu0 0.0
    %135 = vmatprep.subr.mxu0 0.0
    %136 = vmatpush1.msra.mxu0 0.0
    %137 = vmatprep.subr.mxu0 0.0
    %138 = vmatpush1.msra.mxu0 0.0
    %139 = vmatprep.subr.mxu0 0.0
    %140 = vmatpush1.msra.mxu0 0.0
    %141 = vmatprep.subr.mxu0 0.0
    %142 = vmatpush1.msra.mxu0 0.0
    %143 = vmatprep.subr.mxu0 0.0
    %144 = vmatpush1.msra.mxu0 0.0
    %145 = vmatprep.subr.mxu0 0.0
    %146 = vmatpush1.msra.mxu0 0.0
    %147 = vmatprep.subr.mxu0 0.0
    %148 = vmatpush1.msra.mxu0 0.0
    %149 = vmatprep.subr.mxu0 0.0
    %150 = vmatpush1.msra.mxu0 0.0
    %151 = vmatprep.subr.mxu0 0.0
    %152 = vmatpush1.msra.mxu0 0.0
    %153 = vmatprep.subr.mxu0 0.0
    %154 = vmatpush1.msra.mxu0 0.0
    %155 = vmatprep.subr.mxu0 0.0
    %156 = vmatpush1.msra.mxu0 0.0
    %157 = vmatprep.subr.mxu0 0.0
    %158 = vmatpush1.msra.mxu0 0.0
    %159 = vmatprep.subr.mxu0 0.0
    %160 = vmatpush1.msra.mxu0 0.0
    %161 = vmatprep.subr.mxu0 0.0
    %162 = vmatpush1.msra.mxu0 0.0
    %163 = vmatprep.subr.mxu0 0.0
    %164 = vmatpush1.msra.mxu0 0.0
    %165 = vmatprep.subr.mxu0 0.0
    %166 = vmatpush1.msra.mxu0 0.0
    %167 = vmatprep.subr.mxu0 0.0
    %168 = vmatpush1.msra.mxu0 0.0
    %169 = vmatprep.subr.mxu0 0.0
    %170 = vmatpush1.msra.mxu0 0.0
    %171 = vmatprep.subr.mxu0 0.0
    %172 = vmatpush1.msra.mxu0 0.0
    %173 = vmatprep.mubr.f32.mxu0 0.0
    %174 = vmatmul.mubr.f32.gmra.mrb[0].mxu0 %v26
    %v175 = vpop.f32.mrb[0].mxu0
    %v176 = vadd.f32 %v22, %v175
    %v177 = vpop.f32.mrb[0].mxu0
    %178 = vdwg.mxu0
    %s179 = scalar_lea.vmem [#allocation2], 4
    %180 = vst [vmem:[%s179] sm:$0xf] %v176
    %s181 = scalar_lea.vmem %s1, 4
    %v182 = vld [vmem:[%s181] sm:$0xf]
    %s183 = scalar_lea.vmem %s2, 4
    %v184 = vld [vmem:[%s183] sm:$0xf]
    %s185 = scalar_lea.vmem %s0, 16
    %v186 = vld [vmem:[%s185] sm:$0xff]
    %v187 = vld [vmem:[%s185 + $0x8] sm:$0x1]
    %189 = vset.pattern.permute.xlu0 0
    %190 = vperm.xlu0 %189, %v184
    %v191 = vpop.permute.xlu0 %190
    %v194 = vsel %vm24, %v182, 0
    %v197 = vsel %vm28, %v187, 0
    %199 = vmatprep.subr.mxu0 0.0
    %200 = vmatpush1.msra.mxu0 %v186
    %201 = vmatprep.subr.mxu0 0.0
    %202 = vmatpush1.msra.mxu0 %v197
    %203 = vmatprep.subr.mxu0 0.0
    %204 = vmatpush1.msra.mxu0 0.0
    %205 = vmatprep.subr.mxu0 0.0
    %206 = vmatpush1.msra.mxu0 0.0
    %207 = vmatprep.subr.mxu0 0.0
    %208 = vmatpush1.msra.mxu0 0.0
    %209 = vmatprep.subr.mxu0 0.0
    %210 = vmatpush1.msra.mxu0 0.0
    %211 = vmatprep.subr.mxu0 0.0
    %212 = vmatpush1.msra.mxu0 0.0
    %213 = vmatprep.subr.mxu0 0.0
    %214 = vmatpush1.msra.mxu0 0.0
    %215 = vmatprep.subr.mxu0 0.0
    %216 = vmatpush1.msra.mxu0 0.0
    %217 = vmatprep.subr.mxu0 0.0
    %218 = vmatpush1.msra.mxu0 0.0
    %219 = vmatprep.subr.mxu0 0.0
    %220 = vmatpush1.msra.mxu0 0.0
    %221 = vmatprep.subr.mxu0 0.0
    %222 = vmatpush1.msra.mxu0 0.0
    %223 = vmatprep.subr.mxu0 0.0
    %224 = vmatpush1.msra.mxu0 0.0
    %225 = vmatprep.subr.mxu0 0.0
    %226 = vmatpush1.msra.mxu0 0.0
    %227 = vmatprep.subr.mxu0 0.0
    %228 = vmatpush1.msra.mxu0 0.0
    %229 = vmatprep.subr.mxu0 0.0
    %230 = vmatpush1.msra.mxu0 0.0
    %231 = vmatprep.subr.mxu0 0.0
    %232 = vmatpush1.msra.mxu0 0.0
    %233 = vmatprep.subr.mxu0 0.0
    %234 = vmatpush1.msra.mxu0 0.0
    %235 = vmatprep.subr.mxu0 0.0
    %236 = vmatpush1.msra.mxu0 0.0
    %237 = vmatprep.subr.mxu0 0.0
    %238 = vmatpush1.msra.mxu0 0.0
    %239 = vmatprep.subr.mxu0 0.0
    %240 = vmatpush1.msra.mxu0 0.0
    %241 = vmatprep.subr.mxu0 0.0
    %242 = vmatpush1.msra.mxu0 0.0
    %243 = vmatprep.subr.mxu0 0.0
    %244 = vmatpush1.msra.mxu0 0.0
    %245 = vmatprep.subr.mxu0 0.0
    %246 = vmatpush1.msra.mxu0 0.0
    %247 = vmatprep.subr.mxu0 0.0
    %248 = vmatpush1.msra.mxu0 0.0
    %249 = vmatprep.subr.mxu0 0.0
    %250 = vmatpush1.msra.mxu0 0.0
    %251 = vmatprep.subr.mxu0 0.0
    %252 = vmatpush1.msra.mxu0 0.0
    %253 = vmatprep.subr.mxu0 0.0
    %254 = vmatpush1.msra.mxu0 0.0
    %255 = vmatprep.subr.mxu0 0.0
    %256 = vmatpush1.msra.mxu0 0.0
    %257 = vmatprep.subr.mxu0 0.0
    %258 = vmatpush1.msra.mxu0 0.0
    %259 = vmatprep.subr.mxu0 0.0
    %260 = vmatpush1.msra.mxu0 0.0
    %261 = vmatprep.subr.mxu0 0.0
    %262 = vmatpush1.msra.mxu0 0.0
    %263 = vmatprep.mubr.f32.mxu0 0.0
    %264 = vmatmul.mubr.f32.gmra.mrb[0].mxu0 %v194
    %v265 = vpop.f32.mrb[0].mxu0
    %v266 = vadd.f32 %v191, %v265
    %v267 = vpop.f32.mrb[0].mxu0
    %268 = vdwg.mxu0
    %s269 = scalar_lea.vmem [#allocation2], 8
    %270 = vst [vmem:[%s269] sm:$0xf] %v266
    %s271 = scalar_lea.vmem %s0, 80
    %v272 = vld [vmem:[%s271] sm:$0xff]
    %v273 = vld [vmem:[%s271 + $0x8] sm:$0x1]
    %v275 = vsel %vm28, %v273, 0
    %277 = vmatprep.subr.mxu0 0.0
    %278 = vmatpush1.msra.mxu0 %v272
    %279 = vmatprep.subr.mxu0 0.0
    %280 = vmatpush1.msra.mxu0 %v275
    %281 = vmatprep.subr.mxu0 0.0
    %282 = vmatpush1.msra.mxu0 0.0
    %283 = vmatprep.subr.mxu0 0.0
    %284 = vmatpush1.msra.mxu0 0.0
    %285 = vmatprep.subr.mxu0 0.0
    %286 = vmatpush1.msra.mxu0 0.0
    %287 = vmatprep.subr.mxu0 0.0
    %288 = vmatpush1.msra.mxu0 0.0
    %289 = vmatprep.subr.mxu0 0.0
    %290 = vmatpush1.msra.mxu0 0.0
    %291 = vmatprep.subr.mxu0 0.0
    %292 = vmatpush1.msra.mxu0 0.0
    %293 = vmatprep.subr.mxu0 0.0
    %294 = vmatpush1.msra.mxu0 0.0
    %295 = vmatprep.subr.mxu0 0.0
    %296 = vmatpush1.msra.mxu0 0.0
    %297 = vmatprep.subr.mxu0 0.0
    %298 = vmatpush1.msra.mxu0 0.0
    %299 = vmatprep.subr.mxu0 0.0
    %300 = vmatpush1.msra.mxu0 0.0
    %301 = vmatprep.subr.mxu0 0.0
    %302 = vmatpush1.msra.mxu0 0.0
    %303 = vmatprep.subr.mxu0 0.0
    %304 = vmatpush1.msra.mxu0 0.0
    %305 = vmatprep.subr.mxu0 0.0
    %306 = vmatpush1.msra.mxu0 0.0
    %307 = vmatprep.subr.mxu0 0.0
    %308 = vmatpush1.msra.mxu0 0.0
    %309 = vmatprep.subr.mxu0 0.0
    %310 = vmatpush1.msra.mxu0 0.0
    %311 = vmatprep.subr.mxu0 0.0
    %312 = vmatpush1.msra.mxu0 0.0
    %313 = vmatprep.subr.mxu0 0.0
    %314 = vmatpush1.msra.mxu0 0.0
    %315 = vmatprep.subr.mxu0 0.0
    %316 = vmatpush1.msra.mxu0 0.0
    %317 = vmatprep.subr.mxu0 0.0
    %318 = vmatpush1.msra.mxu0 0.0
    %319 = vmatprep.subr.mxu0 0.0
    %320 = vmatpush1.msra.mxu0 0.0
    %321 = vmatprep.subr.mxu0 0.0
    %322 = vmatpush1.msra.mxu0 0.0
    %323 = vmatprep.subr.mxu0 0.0
    %324 = vmatpush1.msra.mxu0 0.0
    %325 = vmatprep.subr.mxu0 0.0
    %326 = vmatpush1.msra.mxu0 0.0
    %327 = vmatprep.subr.mxu0 0.0
    %328 = vmatpush1.msra.mxu0 0.0
    %329 = vmatprep.subr.mxu0 0.0
    %330 = vmatpush1.msra.mxu0 0.0
    %331 = vmatprep.subr.mxu0 0.0
    %332 = vmatpush1.msra.mxu0 0.0
    %333 = vmatprep.subr.mxu0 0.0
    %334 = vmatpush1.msra.mxu0 0.0
    %335 = vmatprep.subr.mxu0 0.0
    %336 = vmatpush1.msra.mxu0 0.0
    %337 = vmatprep.subr.mxu0 0.0
    %338 = vmatpush1.msra.mxu0 0.0
    %339 = vmatprep.subr.mxu0 0.0
    %340 = vmatpush1.msra.mxu0 0.0
    %341 = vmatprep.mubr.f32.mxu0 0.0
    %342 = vmatmul.mubr.f32.gmra.mrb[0].mxu0 %v194
    %v343 = vpop.f32.mrb[0].mxu0
    %v344 = vadd.f32 %v191, %v343
    %v345 = vpop.f32.mrb[0].mxu0
    %346 = vdwg.mxu0
    %s347 = scalar_lea.vmem [#allocation2], 12
    %348 = vst [vmem:[%s347] sm:$0xf] %v344
    %s349 = scalar_lea.vmem %s1, 8
    %v350 = vld [vmem:[%s349] sm:$0xf]
    %s351 = scalar_lea.vmem %s2, 8
    %v352 = vld [vmem:[%s351] sm:$0xf]
    %s353 = scalar_lea.vmem %s0, 32
    %v354 = vld [vmem:[%s353] sm:$0xff]
    %v355 = vld [vmem:[%s353 + $0x8] sm:$0x1]
    %357 = vset.pattern.permute.xlu0 0
    %358 = vperm.xlu0 %357, %v352
    %v359 = vpop.permute.xlu0 %358
    %v362 = vsel %vm24, %v350, 0
    %v365 = vsel %vm28, %v355, 0
    %367 = vmatprep.subr.mxu0 0.0
    %368 = vmatpush1.msra.mxu0 %v354
    %369 = vmatprep.subr.mxu0 0.0
    %370 = vmatpush1.msra.mxu0 %v365
    %371 = vmatprep.subr.mxu0 0.0
    %372 = vmatpush1.msra.mxu0 0.0
    %373 = vmatprep.subr.mxu0 0.0
    %374 = vmatpush1.msra.mxu0 0.0
    %375 = vmatprep.subr.mxu0 0.0
    %376 = vmatpush1.msra.mxu0 0.0
    %377 = vmatprep.subr.mxu0 0.0
    %378 = vmatpush1.msra.mxu0 0.0
    %379 = vmatprep.subr.mxu0 0.0
    %380 = vmatpush1.msra.mxu0 0.0
    %381 = vmatprep.subr.mxu0 0.0
    %382 = vmatpush1.msra.mxu0 0.0
    %383 = vmatprep.subr.mxu0 0.0
    %384 = vmatpush1.msra.mxu0 0.0
    %385 = vmatprep.subr.mxu0 0.0
    %386 = vmatpush1.msra.mxu0 0.0
    %387 = vmatprep.subr.mxu0 0.0
    %388 = vmatpush1.msra.mxu0 0.0
    %389 = vmatprep.subr.mxu0 0.0
    %390 = vmatpush1.msra.mxu0 0.0
    %391 = vmatprep.subr.mxu0 0.0
    %392 = vmatpush1.msra.mxu0 0.0
    %393 = vmatprep.subr.mxu0 0.0
    %394 = vmatpush1.msra.mxu0 0.0
    %395 = vmatprep.subr.mxu0 0.0
    %396 = vmatpush1.msra.mxu0 0.0
    %397 = vmatprep.subr.mxu0 0.0
    %398 = vmatpush1.msra.mxu0 0.0
    %399 = vmatprep.subr.mxu0 0.0
    %400 = vmatpush1.msra.mxu0 0.0
    %401 = vmatprep.subr.mxu0 0.0
    %402 = vmatpush1.msra.mxu0 0.0
    %403 = vmatprep.subr.mxu0 0.0
    %404 = vmatpush1.msra.mxu0 0.0
    %405 = vmatprep.subr.mxu0 0.0
    %406 = vmatpush1.msra.mxu0 0.0
    %407 = vmatprep.subr.mxu0 0.0
    %408 = vmatpush1.msra.mxu0 0.0
    %409 = vmatprep.subr.mxu0 0.0
    %410 = vmatpush1.msra.mxu0 0.0
    %411 = vmatprep.subr.mxu0 0.0
    %412 = vmatpush1.msra.mxu0 0.0
    %413 = vmatprep.subr.mxu0 0.0
    %414 = vmatpush1.msra.mxu0 0.0
    %415 = vmatprep.subr.mxu0 0.0
    %416 = vmatpush1.msra.mxu0 0.0
    %417 = vmatprep.subr.mxu0 0.0
    %418 = vmatpush1.msra.mxu0 0.0
    %419 = vmatprep.subr.mxu0 0.0
    %420 = vmatpush1.msra.mxu0 0.0
    %421 = vmatprep.subr.mxu0 0.0
    %422 = vmatpush1.msra.mxu0 0.0
    %423 = vmatprep.subr.mxu0 0.0
    %424 = vmatpush1.msra.mxu0 0.0
    %425 = vmatprep.subr.mxu0 0.0
    %426 = vmatpush1.msra.mxu0 0.0
    %427 = vmatprep.subr.mxu0 0.0
    %428 = vmatpush1.msra.mxu0 0.0
    %429 = vmatprep.subr.mxu0 0.0
    %430 = vmatpush1.msra.mxu0 0.0
    %431 = vmatprep.mubr.f32.mxu0 0.0
    %432 = vmatmul.mubr.f32.gmra.mrb[0].mxu0 %v362
    %v433 = vpop.f32.mrb[0].mxu0
    %v434 = vadd.f32 %v359, %v433
    %v435 = vpop.f32.mrb[0].mxu0
    %436 = vdwg.mxu0
    %s437 = scalar_lea.vmem [#allocation2], 16
    %438 = vst [vmem:[%s437] sm:$0xf] %v434
    %s439 = scalar_lea.vmem %s0, 96
    %v440 = vld [vmem:[%s439] sm:$0xff]
    %v441 = vld [vmem:[%s439 + $0x8] sm:$0x1]
    %v443 = vsel %vm28, %v441, 0
    %445 = vmatprep.subr.mxu0 0.0
    %446 = vmatpush1.msra.mxu0 %v440
    %447 = vmatprep.subr.mxu0 0.0
    %448 = vmatpush1.msra.mxu0 %v443
    %449 = vmatprep.subr.mxu0 0.0
    %450 = vmatpush1.msra.mxu0 0.0
    %451 = vmatprep.subr.mxu0 0.0
    %452 = vmatpush1.msra.mxu0 0.0
    %453 = vmatprep.subr.mxu0 0.0
    %454 = vmatpush1.msra.mxu0 0.0
    %455 = vmatprep.subr.mxu0 0.0
    %456 = vmatpush1.msra.mxu0 0.0
    %457 = vmatprep.subr.mxu0 0.0
    %458 = vmatpush1.msra.mxu0 0.0
    %459 = vmatprep.subr.mxu0 0.0
    %460 = vmatpush1.msra.mxu0 0.0
    %461 = vmatprep.subr.mxu0 0.0
    %462 = vmatpush1.msra.mxu0 0.0
    %463 = vmatprep.subr.mxu0 0.0
    %464 = vmatpush1.msra.mxu0 0.0
    %465 = vmatprep.subr.mxu0 0.0
    %466 = vmatpush1.msra.mxu0 0.0
    %467 = vmatprep.subr.mxu0 0.0
    %468 = vmatpush1.msra.mxu0 0.0
    %469 = vmatprep.subr.mxu0 0.0
    %470 = vmatpush1.msra.mxu0 0.0
    %471 = vmatprep.subr.mxu0 0.0
    %472 = vmatpush1.msra.mxu0 0.0
    %473 = vmatprep.subr.mxu0 0.0
    %474 = vmatpush1.msra.mxu0 0.0
    %475 = vmatprep.subr.mxu0 0.0
    %476 = vmatpush1.msra.mxu0 0.0
    %477 = vmatprep.subr.mxu0 0.0
    %478 = vmatpush1.msra.mxu0 0.0
    %479 = vmatprep.subr.mxu0 0.0
    %480 = vmatpush1.msra.mxu0 0.0
    %481 = vmatprep.subr.mxu0 0.0
    %482 = vmatpush1.msra.mxu0 0.0
    %483 = vmatprep.subr.mxu0 0.0
    %484 = vmatpush1.msra.mxu0 0.0
    %485 = vmatprep.subr.mxu0 0.0
    %486 = vmatpush1.msra.mxu0 0.0
    %487 = vmatprep.subr.mxu0 0.0
    %488 = vmatpush1.msra.mxu0 0.0
    %489 = vmatprep.subr.mxu0 0.0
    %490 = vmatpush1.msra.mxu0 0.0
    %491 = vmatprep.subr.mxu0 0.0
    %492 = vmatpush1.msra.mxu0 0.0
    %493 = vmatprep.subr.mxu0 0.0
    %494 = vmatpush1.msra.mxu0 0.0
    %495 = vmatprep.subr.mxu0 0.0
    %496 = vmatpush1.msra.mxu0 0.0
    %497 = vmatprep.subr.mxu0 0.0
    %498 = vmatpush1.msra.mxu0 0.0
    %499 = vmatprep.subr.mxu0 0.0
    %500 = vmatpush1.msra.mxu0 0.0
    %501 = vmatprep.subr.mxu0 0.0
    %502 = vmatpush1.msra.mxu0 0.0
    %503 = vmatprep.subr.mxu0 0.0
    %504 = vmatpush1.msra.mxu0 0.0
    %505 = vmatprep.subr.mxu0 0.0
    %506 = vmatpush1.msra.mxu0 0.0
    %507 = vmatprep.subr.mxu0 0.0
    %508 = vmatpush1.msra.mxu0 0.0
    %509 = vmatprep.mubr.f32.mxu0 0.0
    %510 = vmatmul.mubr.f32.gmra.mrb[0].mxu0 %v362
    %v511 = vpop.f32.mrb[0].mxu0
    %v512 = vadd.f32 %v359, %v511
    %v513 = vpop.f32.mrb[0].mxu0
    %514 = vdwg.mxu0
    %s515 = scalar_lea.vmem [#allocation2], 20
    %516 = vst [vmem:[%s515] sm:$0xf] %v512
    %s517 = scalar_lea.vmem %s1, 12
    %v518 = vld [vmem:[%s517] sm:$0xf]
    %s519 = scalar_lea.vmem %s2, 12
    %v520 = vld [vmem:[%s519] sm:$0xf]
    %s521 = scalar_lea.vmem %s0, 48
    %v522 = vld [vmem:[%s521] sm:$0xff]
    %v523 = vld [vmem:[%s521 + $0x8] sm:$0x1]
    %525 = vset.pattern.permute.xlu0 0
    %526 = vperm.xlu0 %525, %v520
    %v527 = vpop.permute.xlu0 %526
    %v530 = vsel %vm24, %v518, 0
    %v533 = vsel %vm28, %v523, 0
    %535 = vmatprep.subr.mxu0 0.0
    %536 = vmatpush1.msra.mxu0 %v522
    %537 = vmatprep.subr.mxu0 0.0
    %538 = vmatpush1.msra.mxu0 %v533
    %539 = vmatprep.subr.mxu0 0.0
    %540 = vmatpush1.msra.mxu0 0.0
    %541 = vmatprep.subr.mxu0 0.0
    %542 = vmatpush1.msra.mxu0 0.0
    %543 = vmatprep.subr.mxu0 0.0
    %544 = vmatpush1.msra.mxu0 0.0
    %545 = vmatprep.subr.mxu0 0.0
    %546 = vmatpush1.msra.mxu0 0.0
    %547 = vmatprep.subr.mxu0 0.0
    %548 = vmatpush1.msra.mxu0 0.0
    %549 = vmatprep.subr.mxu0 0.0
    %550 = vmatpush1.msra.mxu0 0.0
    %551 = vmatprep.subr.mxu0 0.0
    %552 = vmatpush1.msra.mxu0 0.0
    %553 = vmatprep.subr.mxu0 0.0
    %554 = vmatpush1.msra.mxu0 0.0
    %555 = vmatprep.subr.mxu0 0.0
    %556 = vmatpush1.msra.mxu0 0.0
    %557 = vmatprep.subr.mxu0 0.0
    %558 = vmatpush1.msra.mxu0 0.0
    %559 = vmatprep.subr.mxu0 0.0
    %560 = vmatpush1.msra.mxu0 0.0
    %561 = vmatprep.subr.mxu0 0.0
    %562 = vmatpush1.msra.mxu0 0.0
    %563 = vmatprep.subr.mxu0 0.0
    %564 = vmatpush1.msra.mxu0 0.0
    %565 = vmatprep.subr.mxu0 0.0
    %566 = vmatpush1.msra.mxu0 0.0
    %567 = vmatprep.subr.mxu0 0.0
    %568 = vmatpush1.msra.mxu0 0.0
    %569 = vmatprep.subr.mxu0 0.0
    %570 = vmatpush1.msra.mxu0 0.0
    %571 = vmatprep.subr.mxu0 0.0
    %572 = vmatpush1.msra.mxu0 0.0
    %573 = vmatprep.subr.mxu0 0.0
    %574 = vmatpush1.msra.mxu0 0.0
    %575 = vmatprep.subr.mxu0 0.0
    %576 = vmatpush1.msra.mxu0 0.0
    %577 = vmatprep.subr.mxu0 0.0
    %578 = vmatpush1.msra.mxu0 0.0
    %579 = vmatprep.subr.mxu0 0.0
    %580 = vmatpush1.msra.mxu0 0.0
    %581 = vmatprep.subr.mxu0 0.0
    %582 = vmatpush1.msra.mxu0 0.0
    %583 = vmatprep.subr.mxu0 0.0
    %584 = vmatpush1.msra.mxu0 0.0
    %585 = vmatprep.subr.mxu0 0.0
    %586 = vmatpush1.msra.mxu0 0.0
    %587 = vmatprep.subr.mxu0 0.0
    %588 = vmatpush1.msra.mxu0 0.0
    %589 = vmatprep.subr.mxu0 0.0
    %590 = vmatpush1.msra.mxu0 0.0
    %591 = vmatprep.subr.mxu0 0.0
    %592 = vmatpush1.msra.mxu0 0.0
    %593 = vmatprep.subr.mxu0 0.0
    %594 = vmatpush1.msra.mxu0 0.0
    %595 = vmatprep.subr.mxu0 0.0
    %596 = vmatpush1.msra.mxu0 0.0
    %597 = vmatprep.subr.mxu0 0.0
    %598 = vmatpush1.msra.mxu0 0.0
    %599 = vmatprep.mubr.f32.mxu0 0.0
    %600 = vmatmul.mubr.f32.gmra.mrb[0].mxu0 %v530
    %v601 = vpop.f32.mrb[0].mxu0
    %v602 = vadd.f32 %v527, %v601
    %v603 = vpop.f32.mrb[0].mxu0
    %604 = vdwg.mxu0
    %s605 = scalar_lea.vmem [#allocation2], 24
    %606 = vst [vmem:[%s605] sm:$0xf] %v602
    %s607 = scalar_lea.vmem %s0, 112
    %v608 = vld [vmem:[%s607] sm:$0xff]
    %v609 = vld [vmem:[%s607 + $0x8] sm:$0x1]
    %v611 = vsel %vm28, %v609, 0
    %613 = vmatprep.subr.mxu0 0.0
    %614 = vmatpush1.msra.mxu0 %v608
    %615 = vmatprep.subr.mxu0 0.0
    %616 = vmatpush1.msra.mxu0 %v611
    %617 = vmatprep.subr.mxu0 0.0
    %618 = vmatpush1.msra.mxu0 0.0
    %619 = vmatprep.subr.mxu0 0.0
    %620 = vmatpush1.msra.mxu0 0.0
    %621 = vmatprep.subr.mxu0 0.0
    %622 = vmatpush1.msra.mxu0 0.0
    %623 = vmatprep.subr.mxu0 0.0
    %624 = vmatpush1.msra.mxu0 0.0
    %625 = vmatprep.subr.mxu0 0.0
    %626 = vmatpush1.msra.mxu0 0.0
    %627 = vmatprep.subr.mxu0 0.0
    %628 = vmatpush1.msra.mxu0 0.0
    %629 = vmatprep.subr.mxu0 0.0
    %630 = vmatpush1.msra.mxu0 0.0
    %631 = vmatprep.subr.mxu0 0.0
    %632 = vmatpush1.msra.mxu0 0.0
    %633 = vmatprep.subr.mxu0 0.0
    %634 = vmatpush1.msra.mxu0 0.0
    %635 = vmatprep.subr.mxu0 0.0
    %636 = vmatpush1.msra.mxu0 0.0
    %637 = vmatprep.subr.mxu0 0.0
    %638 = vmatpush1.msra.mxu0 0.0
    %639 = vmatprep.subr.mxu0 0.0
    %640 = vmatpush1.msra.mxu0 0.0
    %641 = vmatprep.subr.mxu0 0.0
    %642 = vmatpush1.msra.mxu0 0.0
    %643 = vmatprep.subr.mxu0 0.0
    %644 = vmatpush1.msra.mxu0 0.0
    %645 = vmatprep.subr.mxu0 0.0
    %646 = vmatpush1.msra.mxu0 0.0
    %647 = vmatprep.subr.mxu0 0.0
    %648 = vmatpush1.msra.mxu0 0.0
    %649 = vmatprep.subr.mxu0 0.0
    %650 = vmatpush1.msra.mxu0 0.0
    %651 = vmatprep.subr.mxu0 0.0
    %652 = vmatpush1.msra.mxu0 0.0
    %653 = vmatprep.subr.mxu0 0.0
    %654 = vmatpush1.msra.mxu0 0.0
    %655 = vmatprep.subr.mxu0 0.0
    %656 = vmatpush1.msra.mxu0 0.0
    %657 = vmatprep.subr.mxu0 0.0
    %658 = vmatpush1.msra.mxu0 0.0
    %659 = vmatprep.subr.mxu0 0.0
    %660 = vmatpush1.msra.mxu0 0.0
    %661 = vmatprep.subr.mxu0 0.0
    %662 = vmatpush1.msra.mxu0 0.0
    %663 = vmatprep.subr.mxu0 0.0
    %664 = vmatpush1.msra.mxu0 0.0
    %665 = vmatprep.subr.mxu0 0.0
    %666 = vmatpush1.msra.mxu0 0.0
    %667 = vmatprep.subr.mxu0 0.0
    %668 = vmatpush1.msra.mxu0 0.0
    %669 = vmatprep.subr.mxu0 0.0
    %670 = vmatpush1.msra.mxu0 0.0
    %671 = vmatprep.subr.mxu0 0.0
    %672 = vmatpush1.msra.mxu0 0.0
    %673 = vmatprep.subr.mxu0 0.0
    %674 = vmatpush1.msra.mxu0 0.0
    %675 = vmatprep.subr.mxu0 0.0
    %676 = vmatpush1.msra.mxu0 0.0
    %677 = vmatprep.mubr.f32.mxu0 0.0
    %678 = vmatmul.mubr.f32.gmra.mrb[0].mxu0 %v530
    %v679 = vpop.f32.mrb[0].mxu0
    %v680 = vadd.f32 %v527, %v679
    %v681 = vpop.f32.mrb[0].mxu0
    %682 = vdwg.mxu0
    %s683 = scalar_lea.vmem [#allocation2], 28
    %684 = vst [vmem:[%s683] sm:$0xf] %v680
    // Predicated region
    $region14: #{tpu_custom_call.1} parent=1 // pred_check
      _
    $region15: #{tpu_custom_call.1} parent=1 // pred_check_branch
      %686 = sbr.rel (0) target = $region17
    $region16: #{tpu_custom_call.1} parent=1 // pred_region
      %s688 = ssub.s32 512, 512
      %689 = vsyncadd [#allocation3], %s688
      %s690 = sshll.u32 [#allocation2], 4
      %s691 = int_to_ptr.vmem [resolvable:$true] %s690
      %696 = dma.vmem_to_hbm [thread:$0]  %s691, 512, %s3, [#allocation3], 64, 64, 4
    $region17: #{tpu_custom_call.1} parent=1 // pred_fallthru
      _
    // Predicated region
    $region18: #{tpu_custom_call.1} parent=1 // pred_check
      _
    $region19: #{tpu_custom_call.1} parent=1 // pred_check_branch
      %698 = sbr.rel (0) target = $region21
    $region20: #{tpu_custom_call.1} parent=1 // pred_region
      %699 = dma.done [#allocation3], 512
    $region21: #{tpu_custom_call.1} parent=1 // pred_fallthru
      _
    %700 = vsyncpa [#allocation3], 1

</llo_original>
